<compile_context>
chip_gen: v7x
topology: tpu7x:2x2x1
jax: 0.10.0
libtpu: 0.0.40
codegen_flags: <defaults>
</compile_context>

<pallas_src>
import math
import functools
import numpy as np

import jax
import jax.numpy as jnp
from jax.experimental import pallas as pl
from jax.experimental.pallas import tpu as pltpu


# ----------------------------- kernels --------------------------------------


def _shift_h_flat_kernel(x_ref, o_ref, *, shifts, P):
    """dim == 2 (shift along H) on flattened (BC, P=H*W) slabs.

    shifts: tuple of (c0, c1, d) with d = s*W, all static Python ints.
    """
    for c0, c1, d in shifts:
        gc = c1 - c0
        if d == 0:
            o_ref[c0:c1, :] = x_ref[c0:c1, :]
        elif abs(d) >= P:
            # |s| >= H: entire group is zero.
            o_ref[c0:c1, :] = jnp.zeros((gc, P), o_ref.dtype)
        elif d > 0:
            o_ref[c0:c1, 0:P - d] = x_ref[c0:c1, d:P]
            o_ref[c0:c1, P - d:P] = jnp.zeros((gc, d), o_ref.dtype)
        else:  # d < 0
            o_ref[c0:c1, (-d):P] = x_ref[c0:c1, 0:P + d]
            o_ref[c0:c1, 0:(-d)] = jnp.zeros((gc, -d), o_ref.dtype)


def _shift_h_3d_kernel(x_ref, o_ref, *, shifts, H, W):
    """dim == 2 (shift along H) on 3-D (BC, H, W) slabs (W >= 128: lane-aligned).

    shifts: tuple of (c0, c1, s), all static Python ints.
    """
    for c0, c1, s in shifts:
        gc = c1 - c0
        if s == 0:
            o_ref[c0:c1, :, :] = x_ref[c0:c1, :, :]
        elif abs(s) >= H:
            o_ref[c0:c1, :, :] = jnp.zeros((gc, H, W), o_ref.dtype)
        elif s > 0:
            o_ref[c0:c1, 0:H - s, :] = x_ref[c0:c1, s:H, :]
            o_ref[c0:c1, H - s:H, :] = jnp.zeros((gc, s, W), o_ref.dtype)
        else:  # s < 0
            o_ref[c0:c1, (-s):H, :] = x_ref[c0:c1, 0:H + s, :]
            o_ref[c0:c1, 0:(-s), :] = jnp.zeros((gc, -s, W), o_ref.dtype)


def _shift_w_flat_kernel(x_ref, m_ref, o_ref, *, groups, P, W):
    """dim == 3 (shift along W) on flattened (BC, P=H*W) slabs.

    groups: tuple of (c0, c1, s, mrow); mrow indexes a row of m_ref (the
    column-validity mask for shift s, pre-cast to x.dtype), or -1 if unused.
    NOTE: masking is a multiply (1 VPU op, no temporary); masked-out inf/nan in
    the input would propagate as nan instead of 0 (irrelevant for activations).
    """
    rows_needed = sorted({mrow for (_, _, _, mrow) in groups if mrow >= 0})
    mrow_vals = {r: m_ref[r:r + 1, :] for r in rows_needed}   # hoisted loads

    for c0, c1, s, mrow in groups:
        gc = c1 - c0
        if s == 0:
            o_ref[c0:c1, :] = x_ref[c0:c1, :]
        elif abs(s) >= W:
            # |s| >= W: entire group is zero.
            o_ref[c0:c1, :] = jnp.zeros((gc, P), o_ref.dtype)
        elif s > 0:
            m = mrow_vals[mrow][:, 0:P - s]                    # (1, P-s)
            o_ref[c0:c1, 0:P - s] = x_ref[c0:c1, s:P] * m
            o_ref[c0:c1, P - s:P] = jnp.zeros((gc, s), o_ref.dtype)
        else:  # s < 0
            m = mrow_vals[mrow][:, (-s):P]                     # (1, P+s)
            o_ref[c0:c1, (-s):P] = x_ref[c0:c1, 0:P + s] * m
            o_ref[c0:c1, 0:(-s)] = jnp.zeros((gc, -s), o_ref.dtype)


# --------------------------- wrapper helpers ---------------------------------


def _sublane(itemsize):
    # sublane packing: 8 rows (f32), 16 (bf16), 32 (int8)
    return 8 * max(1, 4 // int(itemsize))


def _choose_batch(N, per_image_bytes, budget):
    """Largest divisor B of N s.t. the double-buffered in+out footprint of a
    B-image slab fits the budget, keeping >= 2 grid steps when N >= 2 (v7x)."""
    best = 1
    for B in range(1, N + 1):
        if N % B:
            continue
        if 4 * B * per_image_bytes > budget:
            break
        if N // B < min(2, N):
            continue
        best = B
    return best


def _build_channel_chunks(groups, max_chunk_c, align):
    """Split [0, C) into contiguous chunks of <= max_chunk_c channels, preferring
    group boundaries; oversized groups are split at `align`-channel boundaries."""
    chunks = []
    cur0 = groups[0][0]
    cur1 = cur0
    for (c0, c1, _s) in groups:
        gsz = c1 - c0
        if gsz > max_chunk_c:
            if cur1 > cur0:
                chunks.append((cur0, cur1))
            step = max_chunk_c if max_chunk_c < align else (max_chunk_c // align) * align
            step = max(1, step)
            p = c0
            while p < c1:
                chunks.append((p, min(c1, p + step)))
                p += step
            cur0 = cur1 = c1
        else:
            if cur1 - cur0 + gsz > max_chunk_c:
                chunks.append((cur0, cur1))
                cur0 = c0
            cur1 = c1
    if cur1 > cur0:
        chunks.append((cur0, cur1))
    return chunks


def _shift_chunk(x_chunk, cgroups, dim, budget):
    """Run the shift on one contiguous channel chunk.

    x_chunk: (N, Cc, H, W).  cgroups: list of (c0, c1, s) rebased to the chunk.
    """
    N, Cc, H, W = x_chunk.shape
    P = H * W
    dtype = x_chunk.dtype
    itemsize = jnp.dtype(dtype).itemsize
    sub = _sublane(itemsize)

    use_3d = (dim == 2) and (W >= 128)

    # Padded (VMEM-tiled) per-image slab size, used for batching / limit sizing.
    if use_3d:
        per_image = Cc * (-(-H // sub) * sub) * (-(-W // 128) * 128) * itemsize
    else:
        per_image = (-(-Cc // sub) * sub) * (-(-P // 128) * 128) * itemsize

    B = _choose_batch(N, per_image, budget)
    G = N // B
    BC = B * Cc

    # Replicate the (static) group table across the B batched images.
    bgroups = tuple((b * Cc + c0, b * Cc + c1, s)
                    for b in range(B) for (c0, c1, s) in cgroups)

    vmem_needed = 4 * B * per_image + (4 << 20)
    vmem_limit = int(min(48 << 20, max(32 << 20, vmem_needed)))
    compiler_params = pltpu.CompilerParams(
        dimension_semantics=("parallel",),
        vmem_limit_bytes=vmem_limit)
    cost = pl.CostEstimate(flops=0, transcendentals=0,
                           bytes_accessed=int(2 * N * Cc * P * itemsize))

    if use_3d:
        # dim == 2, W >= 128: keep (BC, H, W) blocks, slice along the sublane axis.
        x_in = x_chunk.reshape(G, BC, H, W)
        kernel = functools.partial(_shift_h_3d_kernel, shifts=bgroups, H=H, W=W)
        out = pl.pallas_call(
            kernel,
            out_shape=jax.ShapeDtypeStruct((G, BC, H, W), dtype),
            grid=(G,),
            in_specs=[pl.BlockSpec((None, BC, H, W), lambda n: (n, 0, 0, 0))],
            out_specs=pl.BlockSpec((None, BC, H, W), lambda n: (n, 0, 0, 0)),
            compiler_params=compiler_params,
            cost_estimate=cost,
        )(x_in)
        return out.reshape(N, Cc, H, W)

    x_in = x_chunk.reshape(G, BC, P)

    if dim == 2:
        # Flat shift by d = s*W (lane-dense layout for W < 128).
        shifts = tuple((c0, c1, s * W) for (c0, c1, s) in bgroups)
        kernel = functools.partial(_shift_h_flat_kernel, shifts=shifts, P=P)
        out = pl.pallas_call(
            kernel,
            out_shape=jax.ShapeDtypeStruct((G, BC, P), dtype),
            grid=(G,),
            in_specs=[pl.BlockSpec((None, BC, P), lambda n: (n, 0, 0))],
            out_specs=pl.BlockSpec((None, BC, P), lambda n: (n, 0, 0)),
            compiler_params=compiler_params,
            cost_estimate=cost,
        )(x_in)
        return out.reshape(N, Cc, H, W)

    # dim == 3: flat shift by s plus a per-shift column-validity mask (x.dtype),
    # deduplicated over groups and batched replicas; constant block -> DMA'd once.
    w_idx = np.arange(P, dtype=np.int64) % W
    svals = sorted({s for (_, _, s) in cgroups if 0 < abs(s) < W})
    n_rows = max(1, len(svals))
    mask_np = np.ones((n_rows, P), dtype=np.float32)
    srow = {}
    for i, s in enumerate(svals):
        srow[s] = i
        valid = (w_idx + s >= 0) & (w_idx + s < W)
        mask_np[i] = valid.astype(np.float32)
    mask = jnp.asarray(mask_np, dtype=dtype)

    groups4 = tuple((c0, c1, s, srow.get(s, -1)) for (c0, c1, s) in bgroups)
    kernel = functools.partial(_shift_w_flat_kernel, groups=groups4, P=P, W=W)
    out = pl.pallas_call(
        kernel,
        out_shape=jax.ShapeDtypeStruct((G, BC, P), dtype),
        grid=(G,),
        in_specs=[pl.BlockSpec((None, BC, P), lambda n: (n, 0, 0)),
                  pl.BlockSpec((n_rows, P), lambda n: (0, 0))],
        out_specs=pl.BlockSpec((None, BC, P), lambda n: (n, 0, 0)),
        compiler_params=compiler_params,
        cost_estimate=cost,
    )(x_in, mask)
    return out.reshape(N, Cc, H, W)


def shift_pallas(x, kernel_size, dim, *, vmem_budget_bytes=None):
    """Pallas TPU implementation of Shift(kernel_size, dim).forward(x), NCHW."""
    assert dim in (2, 3)
    assert kernel_size % 2 == 1
    if kernel_size == 1:
        return x
    assert kernel_size >= 3

    N, C, H, W = x.shape
    P = H * W
    group = int(math.ceil(C / kernel_size))
    num_groups = (C - 1) // group + 1
    half = kernel_size // 2
    itemsize = jnp.dtype(x.dtype).itemsize
    sub = _sublane(itemsize)

    # Static per-group channel ranges and shift values.
    groups = [(g * group, min(C, (g + 1) * group), half - g) for g in range(num_groups)]

    # Conservative VMEM traffic budget (double-buffered in+out) — sized for v7x
    # (64 MiB VMEM per TC); also fine on v5e/v6e.
    budget = int(vmem_budget_bytes) if vmem_budget_bytes else (40 << 20)

    use_3d = (dim == 2) and (W >= 128)
    if use_3d:
        per_channel = (-(-H // sub) * sub) * (-(-W // 128) * 128) * itemsize
    else:
        per_channel = (-(-P // 128) * 128) * itemsize

    if 4 * C * per_channel <= budget:
        chunks = [(0, C)]
    else:
        # Rare fallback for very large per-image slabs: group-aligned channel
        # chunks, each its own pallas_call, reassembled with a concat.
        max_chunk_c = max(1, budget // (4 * per_channel))
        chunks = _build_channel_chunks(groups, max_chunk_c, sub)

    outs = []
    for (cc0, cc1) in chunks:
        cgroups = []
        for (c0, c1, s) in groups:
            lo, hi = max(c0, cc0), min(c1, cc1)
            if lo < hi:
                cgroups.append((lo - cc0, hi - cc0, s))
        x_chunk = x if (cc0, cc1) == (0, C) else x[:, cc0:cc1]
        outs.append(_shift_chunk(x_chunk, cgroups, dim, budget))

    out = outs[0] if len(outs) == 1 else jnp.concatenate(outs, axis=1)
    return out


def shift_reference(x, kernel_size, dim):
    """Pure numpy reference mirroring the CUDA kernel semantics."""
    x = np.asarray(x)
    if kernel_size == 1:
        return x
    N, C, H, W = x.shape
    group = int(math.ceil(C / kernel_size))
    out = np.zeros_like(x)
    for c in range(C):
        s = kernel_size // 2 - (c // group)
        if dim == 2:
            h_dst = slice(max(0, -s), min(H, H - s))
            h_src = slice(max(0, s), min(H, H + s))
            out[:, c, h_dst, :] = x[:, c, h_src, :]
        else:
            w_dst = slice(max(0, -s), min(W, W - s))
            w_src = slice(max(0, s), min(W, W + s))
            out[:, c, :, w_dst] = x[:, c, :, w_src]
    return out


if __name__ == "__main__":
    key = jax.random.PRNGKey(0)
    k1, k2, k3, k4 = jax.random.split(key, 4)

    # Primary small test, matching the module's NCHW usage.
    x1 = jax.random.normal(k1, (2, 4, 16, 16), dtype=jnp.float32)
    # W >= 128 (and not a multiple of 128), H not a multiple of 8, kernel_size=5
    # so some groups have |shift| >= H/W (all-zero branch); exercises 3-D dim==2 path.
    x2 = jax.random.normal(k2, (1, 10, 2, 130), dtype=jnp.float32)
    # Small slabs with N=8 -> exercises image batching (B=4, 2 parallel grid steps).
    x3 = jax.random.normal(k3, (8, 4, 16, 16), dtype=jnp.float32)
    # bf16 activations with sublane-aligned channel groups (AS-MLP-like C=96, ks=3).
    x4 = jax.random.normal(k4, (2, 96, 8, 8), dtype=jnp.bfloat16)

    cases = [
        (x1, 3, None),       # baseline
        (x2, 5, None),       # 3-D H-shift path + all-zero groups
        (x3, 3, None),       # image batching
        (x4, 3, None),       # bf16
        (x1, 3, 8 * 1024),   # tiny budget -> forced channel-chunking fallback
    ]
    for x, ks, budget in cases:
        for dim in (2, 3):
            y = jax.block_until_ready(shift_pallas(x, ks, dim, vmem_budget_bytes=budget))
            expected = shift_reference(np.asarray(x), ks, dim)
            np.testing.assert_allclose(np.asarray(y).astype(np.float32),
                                       np.asarray(expected).astype(np.float32),
                                       rtol=0, atol=0)

    print("KERNEL_OK")
</pallas_src>

<mosaic_0001>
module attributes {stable_mosaic.version = 11 : i64} {
  func.func @_shift_h_flat_kernel(%arg0: i32, %arg1: memref<1x4x256xf32, #tpu.memory_space<vmem>>, %arg2: memref<1x4x256xf32, #tpu.memory_space<vmem>>) attributes {dimension_semantics = [#tpu.dimension_semantics<parallel>], iteration_bounds = array<i64: 2>, scalar_prefetch = 0 : i64, scratch_operands = 0 : i64, tpu.core_type = #tpu.core_type<tc>, window_params = [{transform_indices = @transform_0, window_bounds = array<i64: 1, 4, 256>}, {transform_indices = @transform_1, window_bounds = array<i64: 1, 4, 256>}]} {
    %c0 = arith.constant 0 : index
    %c0_0 = arith.constant 0 : index
    %c16 = arith.constant 16 : index
    %0 = vector.load %arg1[%c0, %c0_0, %c16] : memref<1x4x256xf32, #tpu.memory_space<vmem>>, vector<1x2x240xf32>
    %1 = vector.shape_cast %0 : vector<1x2x240xf32> to vector<2x240xf32>
    %c0_1 = arith.constant 0 : index
    %c0_2 = arith.constant 0 : index
    %c0_3 = arith.constant 0 : index
    %2 = vector.load %arg2[%c0_1, %c0_2, %c0_3] : memref<1x4x256xf32, #tpu.memory_space<vmem>>, vector<1x2x240xf32>
    %3 = vector.shape_cast %2 : vector<1x2x240xf32> to vector<2x240xf32>
    %4 = vector.shape_cast %1 : vector<2x240xf32> to vector<1x2x240xf32>
    tpu.vector_store %arg2[%c0_1, %c0_2, %c0_3], %4 {strides = array<i32>} : memref<1x4x256xf32, #tpu.memory_space<vmem>>, vector<1x2x240xf32>,
    %cst = arith.constant 0.000000e+00 : f32
    %5 = vector.broadcast %cst : f32 to vector<2x16xf32>
    %c0_4 = arith.constant 0 : index
    %c0_5 = arith.constant 0 : index
    %c240 = arith.constant 240 : index
    %6 = vector.load %arg2[%c0_4, %c0_5, %c240] : memref<1x4x256xf32, #tpu.memory_space<vmem>>, vector<1x2x16xf32>
    %7 = vector.shape_cast %6 : vector<1x2x16xf32> to vector<2x16xf32>
    %8 = vector.shape_cast %5 : vector<2x16xf32> to vector<1x2x16xf32>
    tpu.vector_store %arg2[%c0_4, %c0_5, %c240], %8 {strides = array<i32>} : memref<1x4x256xf32, #tpu.memory_space<vmem>>, vector<1x2x16xf32>,
    %c0_6 = arith.constant 0 : index
    %c2 = arith.constant 2 : index
    %c0_7 = arith.constant 0 : index
    %9 = vector.load %arg1[%c0_6, %c2, %c0_7] : memref<1x4x256xf32, #tpu.memory_space<vmem>>, vector<1x2x256xf32>
    %10 = vector.shape_cast %9 : vector<1x2x256xf32> to vector<2x256xf32>
    %c0_8 = arith.constant 0 : index
    %c2_9 = arith.constant 2 : index
    %c0_10 = arith.constant 0 : index
    %11 = vector.load %arg2[%c0_8, %c2_9, %c0_10] : memref<1x4x256xf32, #tpu.memory_space<vmem>>, vector<1x2x256xf32>
    %12 = vector.shape_cast %11 : vector<1x2x256xf32> to vector<2x256xf32>
    %13 = vector.shape_cast %10 : vector<2x256xf32> to vector<1x2x256xf32>
    tpu.vector_store %arg2[%c0_8, %c2_9, %c0_10], %13 {strides = array<i32>} : memref<1x4x256xf32, #tpu.memory_space<vmem>>, vector<1x2x256xf32>,
    return
  }
  func.func @transform_0(%arg0: i32) -> (i32, i32, i32) {
    %c0_i32 = arith.constant 0 : i32
    %c0_i32_0 = arith.constant 0 : i32
    %c0_i32_1 = arith.constant 0 : i32
    return %arg0, %c0_i32, %c0_i32_0 : i32, i32, i32
  }
  func.func @transform_1(%arg0: i32) -> (i32, i32, i32) {
    %c0_i32 = arith.constant 0 : i32
    %c0_i32_0 = arith.constant 0 : i32
    %c0_i32_1 = arith.constant 0 : i32
    return %arg0, %c0_i32, %c0_i32_0 : i32, i32, i32
  }
}

</mosaic_0001>

<llo_original>
// kernel: tpu_custom_call.1
$region0: #{tpu_custom_call.1}
  #allocation0 [shape = 'u32[]', space=smem, size = 0x4, offset = 0x4, fixed_abs, tag = 'smem constant byte address 0x4 - core index']
  #allocation1 [shape = 'u32[144,128]{1,0:T(1,128)}', space=vmem, size = 0x12000, scoped, tag = 'internal scratch']
  %s0 = inlined_call_operand.hbm [shape: f32[2,4,256], index: 0, kind: input, shape index: {}]
  %s1 = inlined_call_operand.hbm [shape: f32[2,4,256], index: 1, kind: output, shape index: {}]
  %s2 = sld [smem:[#allocation0]]
  $region41: #{tpu_custom_call.1} parent=0
    _
  %s4 = ssub.s32 1, %s2
  %s5 = scalar_select 0, %s4, %s2
  $region1: #{tpu_custom_call.1} parent=0
    #allocation2 [shape = 'u8[8192]{0}', space=vmem, size = 0x2000, scoped, tag = 'input window, operand 0']
    #allocation3 [shape = 's32[2]{0}', space=sflag, size = 0x8, scoped, tag = 'scoped memory for tpu_custom_call.1']
    #allocation4 [shape = 's32[2]{0}', space=sflag, size = 0x8, scoped, tag = 'scoped memory for tpu_custom_call.1']
    #allocation5 [shape = 'u8[8192]{0}', space=vmem, size = 0x2000, scoped, tag = 'output window, operand 0']
    %6 = vsyncpa [#allocation3], 0
    %s7 = scalar_lea.sflag [#allocation3], 1
    %8 = vsyncpa %s7, 0
    %9 = vsyncpa [#allocation4], 0
    %s10 = scalar_lea.sflag [#allocation4], 1
    %11 = vsyncpa %s10, 0
    loop: start=0, step=1, limit=4
    $region2: #{tpu_custom_call.1} parent=1 // loop_pre_header
      _
    $region3: #{tpu_custom_call.1} parent=1 // loop_header
      %s13 = sphi 0, %s17
      %p14 = scmp.ge.s32.totalorder %s13, 4
      %s23 = sphi 0, %s25
      %s26 = sphi 0, %s23
      %s27 = sphi 0, %s26
      %s43 = sphi 0, %s27
      %s49 = sphi 0, %s51
      %s52 = sphi 0, %s49
      %s53 = sphi 0, %s52
      %s69 = sphi 0, %s53
    $region4: #{tpu_custom_call.1} parent=1 // loop_header_branch
      %16 = sbr.rel (%p14) target = $region8
    $region5: #{tpu_custom_call.1} parent=1 // loop_body
      %s18 = ssub.s32 %s13, 1
      %s19 = ssub.s32 %s13, 2
      %s20 = sadd.s32 %s13, 1
      %s21 = ssub.s32 %s13, %s20
      %p22 = scmp.eq.s32.totalorder %s21, 0
      %s24 = sadd.s32 %s23, 1
      %s25 = scalar_select %p22, %s23, %s24
      %p28 = pneg %p22
      %p29 = scmp.eq.s32.totalorder %s13, 1
      %p30 = por %p28, %p29
      %p31 = scmp.ne.s32.totalorder %s23, %s26
      %p32 = scmp.eq.s32.totalorder %s13, 0
      %p33 = por %p31, %p32
      %p34 = scmp.ne.s32.totalorder %s23, %s26
      %p35 = scmp.eq.s32.totalorder %s18, 1
      %p36 = por %p34, %p35
      %p37 = scmp.ne.s32.totalorder %s26, %s27
      %p38 = scmp.eq.s32.totalorder %s18, 0
      %p39 = por %p37, %p38
      %p40 = scmp.ne.s32.totalorder %s26, %s27
      %p41 = scmp.eq.s32.totalorder %s19, 1
      %p42 = por %p40, %p41
      %p44 = scmp.ne.s32.totalorder %s27, %s43
      %p45 = scmp.eq.s32.totalorder %s19, 0
      %p46 = por %p44, %p45
      %s47 = ssub.s32 %s13, %s20
      %p48 = scmp.eq.s32.totalorder %s47, 0
      %s50 = sadd.s32 %s49, 1
      %s51 = scalar_select %p48, %s49, %s50
      %p54 = pneg %p48
      %p55 = scmp.eq.s32.totalorder %s13, 1
      %p56 = por %p54, %p55
      %p57 = scmp.ne.s32.totalorder %s49, %s52
      %p58 = scmp.eq.s32.totalorder %s13, 0
      %p59 = por %p57, %p58
      %p60 = scmp.ne.s32.totalorder %s49, %s52
      %p61 = scmp.eq.s32.totalorder %s18, 1
      %p62 = por %p60, %p61
      %p63 = scmp.ne.s32.totalorder %s52, %s53
      %p64 = scmp.eq.s32.totalorder %s18, 0
      %p65 = por %p63, %p64
      %p66 = scmp.ne.s32.totalorder %s52, %s53
      %p67 = scmp.eq.s32.totalorder %s19, 1
      %p68 = por %p66, %p67
      %p70 = scmp.ne.s32.totalorder %s53, %s69
      %p71 = scmp.eq.s32.totalorder %s19, 0
      %p72 = por %p70, %p71
      %p73 = scmp.le.s32.totalorder 1, %s13
      %p74 = scmp.lt.s32.totalorder %s13, 3
      %p75 = pnand %p73, %p74
      %p76 = pneg %p75
      // Predicated region
      $region9: #{tpu_custom_call.1} parent=5 // pred_check
        _
      $region10: #{tpu_custom_call.1} parent=5 // pred_check_branch
        %78 = sbr.rel (%p75) target = $region12
      $region11: #{tpu_custom_call.1} parent=5 // pred_region
        %s79 = ssub.s32 %s13, 1
      $region12: #{tpu_custom_call.1} parent=5 // pred_fallthru
        _
      %p80 = scmp.lt.s32.totalorder %s13, 2
      // Predicated region
      $region13: #{tpu_custom_call.1} parent=5 // pred_check
        %p81 = pneg %p80
      $region14: #{tpu_custom_call.1} parent=5 // pred_check_branch
        %83 = sbr.rel (%p81) target = $region16
      $region15: #{tpu_custom_call.1} parent=5 // pred_region
        // Predicated region
        $region17: #{tpu_custom_call.1} parent=15 // pred_check
          %p84 = pneg %p33
        $region18: #{tpu_custom_call.1} parent=15 // pred_check_branch
          %86 = sbr.rel (%p84) target = $region20
        $region19: #{tpu_custom_call.1} parent=15 // pred_region
          %s87 = sand.u32 %s23, 1
          %s88 = scalar_lea.sflag [#allocation3], %s87
          %s89 = sand.u32 %s23, 1
          %s90 = smul.addr %s89, 8
          %s91 = scalar_lea.vmem [#allocation2], %s90
          %s93 = ssub.s32 128, 128
          %94 = vsyncadd %s88, %s93
          %s95 = smul.addr %s13, 2
          %s96 = smul.addr %s95, 64
          %s97 = scalar_lea.hbm %s0, %s96
          %s99 = sshll.u32 %s91, 4
          %s100 = int_to_ptr.vmem [resolvable:$true] %s99
          %102 = dma.hbm_to_vmem [thread:$0]  %s97, 128, %s100, %s88
        $region20: #{tpu_custom_call.1} parent=15 // pred_fallthru
          _
      $region16: #{tpu_custom_call.1} parent=5 // pred_fallthru
        _
      %p103 = scmp.le.s32.totalorder 1, %s13
      %p104 = scmp.lt.s32.totalorder %s13, 3
      %p105 = pnand %p103, %p104
      %p106 = pneg %p105
      // Predicated region
      $region21: #{tpu_custom_call.1} parent=5 // pred_check
        _
      $region22: #{tpu_custom_call.1} parent=5 // pred_check_branch
        %108 = sbr.rel (%p105) target = $region24
      $region23: #{tpu_custom_call.1} parent=5 // pred_region
        %s109 = ssub.s32 %s13, 1
        %s110 = sand.u32 %s26, 1
        %s111 = scalar_lea.sflag [#allocation3], %s110
        %s112 = sand.u32 %s26, 1
        %s113 = smul.addr %s112, 8
        %s114 = scalar_lea.vmem [#allocation2], %s113
        // Predicated region
        $region25: #{tpu_custom_call.1} parent=23 // pred_check
          %p115 = pneg %p39
        $region26: #{tpu_custom_call.1} parent=23 // pred_check_branch
          %117 = sbr.rel (%p115) target = $region28
        $region27: #{tpu_custom_call.1} parent=23 // pred_region
          %118 = dma.done %s111, 128
        $region28: #{tpu_custom_call.1} parent=23 // pred_fallthru
          _
        %s119 = sand.u32 %s26, 1
        %s120 = scalar_lea.sflag [#allocation3], %s119
        %s121 = sand.u32 %s26, 1
        %s122 = smul.addr %s121, 8
        %s123 = scalar_lea.vmem [#allocation2], %s122
        %p124 = pneg %p39
        %p125 = pneg %p36
        %p126 = pneg %p65
        %p127 = pneg %p62
        %s128 = sand.u32 %s52, 1
        %s129 = scalar_lea.sflag [#allocation4], %s128
        %s130 = sand.u32 %s52, 1
        %s131 = smul.addr %s130, 8
        %s132 = scalar_lea.vmem [#allocation5], %s131
        %v133 = vld [vmem:[%s114] sm:$0x33]
        %135 = vrot.lane.b32.xlu0 %v133, 112
        %v136 = vpop.permute.xlu0 %135
        %v137 = vrot.slane %v136, 4
        %vm138 = vcmask 916480
        %v139 = vsel %vm138, %v136, %v137
        %vm141 = vcmask 1041408
        %vm142 = vcmask 914436
        %vm143 = vmor %vm142, %vm141
        %144 = vst.msk [vmem:[%s132] sm:$0x33] %vm143, %v139
        %vm145 = vcmask 1042304
        %146 = vst.msk [vmem:[%s132 + $0x4] sm:$0x3] %vm145, 0.0
        %v147 = vld [vmem:[%s114] sm:$0xcc]
        %148 = vst [vmem:[%s132] sm:$0xcc] %v147
        %s149 = sand.u32 %s52, 1
        %s150 = scalar_lea.sflag [#allocation4], %s149
        %s151 = sand.u32 %s52, 1
        %s152 = smul.addr %s151, 8
        %s153 = scalar_lea.vmem [#allocation5], %s152
        // Predicated region
        $region29: #{tpu_custom_call.1} parent=23 // pred_check
          %p154 = pneg %p62
        $region30: #{tpu_custom_call.1} parent=23 // pred_check_branch
          %156 = sbr.rel (%p154) target = $region32
        $region31: #{tpu_custom_call.1} parent=23 // pred_region
          %s158 = ssub.s32 128, 128
          %159 = vsyncadd %s150, %s158
          %s160 = smul.addr %s18, 2
          %s161 = smul.addr %s160, 64
          %s162 = scalar_lea.hbm %s1, %s161
          %s164 = sshll.u32 %s153, 4
          %s165 = int_to_ptr.vmem [resolvable:$true] %s164
          %167 = dma.vmem_to_hbm [thread:$0]  %s165, 128, %s162, %s150
        $region32: #{tpu_custom_call.1} parent=23 // pred_fallthru
          _
      $region24: #{tpu_custom_call.1} parent=5 // pred_fallthru
        _
      %p168 = scmp.le.s32.totalorder 2, %s13
      // Predicated region
      $region33: #{tpu_custom_call.1} parent=5 // pred_check
        %p169 = pneg %p168
      $region34: #{tpu_custom_call.1} parent=5 // pred_check_branch
        %171 = sbr.rel (%p169) target = $region36
      $region35: #{tpu_custom_call.1} parent=5 // pred_region
        %s172 = ssub.s32 %s13, 2
        // Predicated region
        $region37: #{tpu_custom_call.1} parent=35 // pred_check
          %p173 = pneg %p68
        $region38: #{tpu_custom_call.1} parent=35 // pred_check_branch
          %175 = sbr.rel (%p173) target = $region40
        $region39: #{tpu_custom_call.1} parent=35 // pred_region
          %s176 = sand.u32 %s53, 1
          %s177 = scalar_lea.sflag [#allocation4], %s176
          %s178 = sand.u32 %s53, 1
          %s179 = smul.addr %s178, 8
          %s180 = scalar_lea.vmem [#allocation5], %s179
          %181 = dma.done %s177, 128
        $region40: #{tpu_custom_call.1} parent=35 // pred_fallthru
          _
      $region36: #{tpu_custom_call.1} parent=5 // pred_fallthru
        _
    $region6: #{tpu_custom_call.1} parent=1 // loop_footer
      %s17 = sadd.s32 1, %s13
    $region7: #{tpu_custom_call.1} parent=1 // loop_footer_branch
      %12 = sbr.rel target = $region3
    $region8: #{tpu_custom_call.1} parent=1 // loop_exit
      _
    %182 = vsyncpa [#allocation3], 1
    %s183 = scalar_lea.sflag [#allocation3], 1
    %184 = vsyncpa %s183, 1
    %185 = vsyncpa [#allocation4], 1
    %s186 = scalar_lea.sflag [#allocation4], 1
    %187 = vsyncpa %s186, 1

</llo_original>
